<compile_context>
chip_gen: v7x
topology: tpu7x:2x2x1
jax: 0.10.0
libtpu: 0.0.40
codegen_flags: <defaults>
</compile_context>

<pallas_src>
import functools

import jax
import jax.numpy as jnp
from jax.experimental import pallas as pl
from jax.experimental.pallas import tpu as pltpu


# ---------------------------------------------------------------------------
# Fused kernel: streamed MSE + (clamp -> cbrt -> D -> sigmoid -> sum)
# ---------------------------------------------------------------------------
def _fused_loss_kernel(o_ref, t_ref, w1_ref, p_ref, out_ref, acc_ref, h_ref):
    """Grid = (row tiles, K tiles); both reduction axes ("arbitrary").

    o_ref, t_ref : (TM, TK)       full-res output / target tile
    w1_ref       : (TK, HID_PAD)  layer-1 slab (downsample + 3x-stack folded in)
    p_ref        : (8, HID_PAD)   row0 = [b1, 1, 0...], row1 = [w2, b2, 0...]
    out_ref      : SMEM (2,)      raw [sum_sq_err, sum_sigmoid]
    acc_ref      : SMEM (2,)      scalar accumulators across the whole grid
    h_ref        : VMEM (TM, HID_PAD) layer-1 accumulator over the K axis
    """
    m_i = pl.program_id(0)
    k_i = pl.program_id(1)
    k_last = pl.num_programs(1) - 1

    # ---- init accumulators ----
    @pl.when((m_i == 0) & (k_i == 0))
    def _():
        acc_ref[0] = jnp.float32(0.0)      # sum of squared errors
        acc_ref[1] = jnp.float32(0.0)      # sum of sigmoid(D(.)) over examples

    @pl.when(k_i == 0)
    def _():
        h_ref[...] = jnp.zeros_like(h_ref)

    o = o_ref[...].astype(jnp.float32)     # (TM, TK)
    t = t_ref[...].astype(jnp.float32)

    # ---- MSE partial: streamed per-tile sum of squares ----
    d = o - t
    acc_ref[0] = acc_ref[0] + jnp.sum(d * d)

    # ---- GAN branch: clamp -> cbrt on the resident tile, layer-1 partial ----
    x = jnp.clip(o, 0.0, 1.0)
    # root_scaling: x ** (1/3); x >= 0 after clamp, exp(log(0)/3) == 0 exactly.
    x = jnp.exp(jnp.log(x) * (1.0 / 3.0))
    h_ref[...] += jnp.dot(x, w1_ref[...], preferred_element_type=jnp.float32)

    # ---- finalize discriminator for this row tile on the last K step ----
    @pl.when(k_i == k_last)
    def _():
        b1 = p_ref[0:1, :]                 # (1, HID_PAD); lane HID holds 1.0
        w2 = p_ref[1:2, :]                 # (1, HID_PAD); lane HID holds b2
        h = jnp.maximum(h_ref[...] + b1, 0.0)
        # N=1 second layer: VPU multiply + lane reduce (no MXU push for 1 lane).
        # b2 is contributed by the constant-1 hidden unit, so no scalar add.
        logits = jnp.sum(h * w2, axis=-1, keepdims=True)        # (TM, 1)
        sig = pl.reciprocal(1.0 + jnp.exp(-logits), approx=False)
        acc_ref[1] = acc_ref[1] + jnp.sum(sig)

    # ---- emit both raw sums once, at the very last grid step ----
    @pl.when((m_i == pl.num_programs(0) - 1) & (k_i == k_last))
    def _():
        out_ref[0] = acc_ref[0]
        out_ref[1] = acc_ref[1]


# ---------------------------------------------------------------------------
# Tile selection helpers
# ---------------------------------------------------------------------------
def _divisor_tile(total, want, step):
    """Largest multiple of `step` dividing `total` that is <= want (else total)."""
    if want >= total:
        return total
    t = (want // step) * step
    while t >= step:
        if total % t == 0:
            return t
        t -= step
    return total


def _choose_tiles(m, hw, hid_pad, target_bytes=2 << 20):
    tm = _divisor_tile(m, 256, 8)
    # Per-K-step streamed bytes: o tile + t tile + w1_eff slab (f32).
    bytes_per_k = 4 * (2 * tm + hid_pad)
    want_k = max(128, (target_bytes // bytes_per_k) // 128 * 128)
    if hw >= 256:
        # Keep at least two K steps so the DMA pipeline has work to overlap,
        # even at small demo sizes.
        want_k = min(want_k, max(128, (hw // 2) // 128 * 128))
    tk = _divisor_tile(hw, want_k, 128)
    return tm, tk


# ---------------------------------------------------------------------------
# Wrapper (single pallas_call; weight / mean normalization applied outside so
# the kernel never recompiles when `weight` changes)
# ---------------------------------------------------------------------------
def gan_d_mse_loss(output, target, disc_params, gan_img_size, weight):
    B, C, H, W = output.shape
    S = int(gan_img_size)
    M, HW = B * C, H * W
    w1, b1, w2, b2 = disc_params
    hid = w1.shape[-1]
    hid_pad = ((hid + 1 + 127) // 128) * 128   # lane-dense hidden + 1 bias unit

    # torch.squeeze is a no-op here (no singleton dims).
    # F.interpolate(..., (S,S)), mode='nearest': src = floor(dst * in / out).
    rows = (jnp.arange(S) * H) // S
    cols = (jnp.arange(S) * W) // S
    pix = (rows[:, None] * W + cols[None, :]).reshape(-1)          # (S*S,)

    # Fold the 3x channel stack (three identical copies) into layer 1, then
    # fold the nearest-neighbor pixel selection by scattering those rows into
    # a zero matrix of shape (H*W, HID_PAD).
    w1_sum = w1.reshape(3, S * S, hid).sum(axis=0).astype(jnp.float32)
    w1_sum = jnp.pad(w1_sum, ((0, 0), (0, hid_pad - hid)))          # (S*S, HID_PAD)
    w1_eff = jnp.zeros((HW, hid_pad), jnp.float32).at[pix].set(w1_sum)

    # Packed small params: row0 = [b1, 1, 0...], row1 = [w2, b2, 0...].
    p = jnp.zeros((8, hid_pad), jnp.float32)
    p = p.at[0, :hid].set(b1.reshape(-1).astype(jnp.float32))
    p = p.at[0, hid].set(1.0)
    p = p.at[1, :hid].set(w2.reshape(-1).astype(jnp.float32))
    p = p.at[1, hid].set(b2.reshape(-1)[0].astype(jnp.float32))

    o2 = output.reshape(M, HW)      # keep HBM dtype; upcast in-kernel
    t2 = target.reshape(M, HW)

    tm, tk = _choose_tiles(M, HW, hid_pad)
    nm, nk = M // tm, HW // tk

    sums = pl.pallas_call(
        _fused_loss_kernel,
        out_shape=jax.ShapeDtypeStruct((2,), jnp.float32),
        grid=(nm, nk),
        in_specs=[
            pl.BlockSpec((tm, tk), lambda m, k: (m, k)),
            pl.BlockSpec((tm, tk), lambda m, k: (m, k)),
            pl.BlockSpec((tk, hid_pad), lambda m, k: (k, 0)),
            pl.BlockSpec((8, hid_pad), lambda m, k: (0, 0)),
        ],
        out_specs=pl.BlockSpec(memory_space=pltpu.SMEM),
        scratch_shapes=[
            pltpu.SMEM((2,), jnp.float32),            # scalar accumulators
            pltpu.VMEM((tm, hid_pad), jnp.float32),   # layer-1 accumulator
        ],
        compiler_params=pltpu.CompilerParams(
            dimension_semantics=("arbitrary", "arbitrary")),
    )(o2, t2, w1_eff, p)

    lmse = sums[0] / jnp.float32(M * HW)
    lgan = weight * sums[1]
    return lmse + lgan, lmse, lgan


# ---------------------------------------------------------------------------
# Main
# ---------------------------------------------------------------------------
if __name__ == "__main__":
    key = jax.random.PRNGKey(0)
    k1, k2, k3, k4 = jax.random.split(key, 4)

    B, C, H, W = 2, 4, 16, 16      # output / target: NCHW
    S = 8                          # gan_img_size
    HID = 32                       # hidden width of the synthetic discriminator
    weight = 0.1

    output = jax.random.uniform(k1, (B, C, H, W), dtype=jnp.float32)
    target = jax.random.uniform(k2, (B, C, H, W), dtype=jnp.float32)

    # Deterministic synthetic discriminator params (flattened (3,S,S) -> 1 logit).
    w1 = 0.05 * jax.random.normal(k3, (3 * S * S, HID), dtype=jnp.float32)
    b1 = jnp.zeros((1, HID), dtype=jnp.float32)
    w2 = 0.05 * jax.random.normal(k4, (HID, 1), dtype=jnp.float32)
    b2 = jnp.zeros((1, 1), dtype=jnp.float32)

    # gan_img_size is shape-affecting (static); weight stays a traced operand.
    loss_fn = jax.jit(functools.partial(gan_d_mse_loss, gan_img_size=S))
    loss, lmse, lgan = loss_fn(output, target, (w1, b1, w2, b2), weight=weight)
    jax.block_until_ready(loss)

    # Mirrors the module's print('lmse,lgan=', ...), but off the hot path.
    print("lmse,lgan=", float(lmse), float(lgan))
    print("KERNEL_OK")
</pallas_src>

<mosaic_0001>
module attributes {stable_mosaic.version = 11 : i64} {
  func.func @_fused_loss_kernel(%arg0: i32, %arg1: i32, %arg2: memref<8x128xf32, #tpu.memory_space<vmem>>, %arg3: memref<8x128xf32, #tpu.memory_space<vmem>>, %arg4: memref<128x128xf32, #tpu.memory_space<vmem>>, %arg5: memref<8x128xf32, #tpu.memory_space<vmem>>, %arg6: memref<2xf32, #tpu.memory_space<smem>>, %arg7: memref<2xf32, #tpu.memory_space<smem>>, %arg8: memref<8x128xf32, #tpu.memory_space<vmem>>) attributes {dimension_semantics = [#tpu.dimension_semantics<arbitrary>, #tpu.dimension_semantics<arbitrary>], iteration_bounds = array<i64: 1, 2>, scalar_prefetch = 0 : i64, scratch_operands = 2 : i64, tpu.core_type = #tpu.core_type<tc>, window_params = [{transform_indices = @transform_0, window_bounds = array<i64: 8, 128>}, {transform_indices = @transform_1, window_bounds = array<i64: 8, 128>}, {transform_indices = @transform_2, window_bounds = array<i64: 128, 128>}, {pipeline_mode = #tpu.pipeline_mode<synchronous>, transform_indices = @transform_3, window_bounds = array<i64: 8, 128>}, {transform_indices = @transform_4, window_bounds = array<i64: 2>}]} {
    %c0_i32 = arith.constant 0 : i32
    %0 = arith.cmpi eq, %arg0, %c0_i32 : i32
    %c0_i32_0 = arith.constant 0 : i32
    %1 = arith.cmpi eq, %arg1, %c0_i32_0 : i32
    %2 = arith.andi %0, %1 : i1
    %3 = arith.extui %2 : i1 to i32
    %c0_i32_1 = arith.constant 0 : i32
    %4 = arith.cmpi ne, %3, %c0_i32_1 : i32
    scf.if %4 {
      %cst_23 = arith.constant 0.000000e+00 : f32
      %c0_24 = arith.constant 0 : index
      %40 = memref.load %arg7[%c0_24] : memref<2xf32, #tpu.memory_space<smem>>
      memref.store %cst_23, %arg7[%c0_24] : memref<2xf32, #tpu.memory_space<smem>>
      %cst_25 = arith.constant 0.000000e+00 : f32
      %c1 = arith.constant 1 : index
      %41 = memref.load %arg7[%c1] : memref<2xf32, #tpu.memory_space<smem>>
      memref.store %cst_25, %arg7[%c1] : memref<2xf32, #tpu.memory_space<smem>>
    } else {
    }
    %c0_i32_2 = arith.constant 0 : i32
    %5 = arith.cmpi eq, %arg1, %c0_i32_2 : i32
    %6 = arith.extui %5 : i1 to i32
    %c0_i32_3 = arith.constant 0 : i32
    %7 = arith.cmpi ne, %6, %c0_i32_3 : i32
    scf.if %7 {
      %cst_23 = arith.constant 0.000000e+00 : f32
      %40 = vector.broadcast %cst_23 : f32 to vector<8x128xf32>
      %c0_24 = arith.constant 0 : index
      %c0_25 = arith.constant 0 : index
      %41 = vector.load %arg8[%c0_24, %c0_25] : memref<8x128xf32, #tpu.memory_space<vmem>>, vector<8x128xf32>
      tpu.vector_store %arg8[%c0_24, %c0_25], %40 {strides = array<i32>} : memref<8x128xf32, #tpu.memory_space<vmem>>, vector<8x128xf32>,
    } else {
    }
    %c0 = arith.constant 0 : index
    %c0_4 = arith.constant 0 : index
    %8 = vector.load %arg2[%c0, %c0_4] : memref<8x128xf32, #tpu.memory_space<vmem>>, vector<8x128xf32>
    %c0_5 = arith.constant 0 : index
    %c0_6 = arith.constant 0 : index
    %9 = vector.load %arg3[%c0_5, %c0_6] : memref<8x128xf32, #tpu.memory_space<vmem>>, vector<8x128xf32>
    %10 = arith.subf %8, %9 : vector<8x128xf32>
    %c0_7 = arith.constant 0 : index
    %11 = memref.load %arg7[%c0_7] : memref<2xf32, #tpu.memory_space<smem>>
    %12 = arith.mulf %10, %10 : vector<8x128xf32>
    %13 = vector.shape_cast %12 : vector<8x128xf32> to vector<1x8x128xf32>
    %cst = arith.constant dense<0.000000e+00> : vector<1xf32>
    %14 = vector.multi_reduction <add>, %13, %cst [1, 2] : vector<1x8x128xf32> to vector<1xf32>
    %15 = vector.shape_cast %14 : vector<1xf32> to vector<1x1x1xf32>
    %16 = vector.extract %15[0, 0, 0] : f32 from vector<1x1x1xf32>
    %17 = arith.addf %11, %16 : f32
    %c0_8 = arith.constant 0 : index
    %18 = memref.load %arg7[%c0_8] : memref<2xf32, #tpu.memory_space<smem>>
    memref.store %17, %arg7[%c0_8] : memref<2xf32, #tpu.memory_space<smem>>
    %cst_9 = arith.constant 0.000000e+00 : f32
    %cst_10 = arith.constant 1.000000e+00 : f32
    %19 = vector.broadcast %cst_9 : f32 to vector<8x128xf32>
    %20 = arith.maximumf %19, %8 : vector<8x128xf32>
    %21 = vector.broadcast %cst_10 : f32 to vector<8x128xf32>
    %22 = arith.minimumf %21, %20 : vector<8x128xf32>
    %23 = math.log %22 : vector<8x128xf32>
    %cst_11 = arith.constant 0.333333343 : f32
    %24 = vector.broadcast %cst_11 : f32 to vector<8x128xf32>
    %25 = arith.mulf %23, %24 : vector<8x128xf32>
    %26 = math.exp %25 : vector<8x128xf32>
    %c0_12 = arith.constant 0 : index
    %c0_13 = arith.constant 0 : index
    %27 = vector.load %arg8[%c0_12, %c0_13] : memref<8x128xf32, #tpu.memory_space<vmem>>, vector<8x128xf32>
    %c0_14 = arith.constant 0 : index
    %c0_15 = arith.constant 0 : index
    %28 = vector.load %arg4[%c0_14, %c0_15] : memref<128x128xf32, #tpu.memory_space<vmem>>, vector<128x128xf32>
    %cst_16 = arith.constant dense<0.000000e+00> : vector<8x128xf32>
    %29 = tpu.matmul %26, %28, %cst_16 {dimension_numbers = #tpu.dot_dimension_numbers<[1], [0], [0], [1], [0, 0, 1, 1], [], []>} : vector<8x128xf32>, vector<128x128xf32>, vector<8x128xf32> -> vector<8x128xf32>
    %30 = arith.addf %27, %29 : vector<8x128xf32>
    %c0_17 = arith.constant 0 : index
    %c0_18 = arith.constant 0 : index
    %31 = vector.load %arg8[%c0_17, %c0_18] : memref<8x128xf32, #tpu.memory_space<vmem>>, vector<8x128xf32>
    tpu.vector_store %arg8[%c0_17, %c0_18], %30 {strides = array<i32>} : memref<8x128xf32, #tpu.memory_space<vmem>>, vector<8x128xf32>,
    %c1_i32 = arith.constant 1 : i32
    %32 = arith.cmpi eq, %arg1, %c1_i32 : i32
    %33 = arith.extui %32 : i1 to i32
    %c0_i32_19 = arith.constant 0 : i32
    %34 = arith.cmpi ne, %33, %c0_i32_19 : i32
    scf.if %34 {
      %c0_23 = arith.constant 0 : index
      %c0_24 = arith.constant 0 : index
      %40 = vector.load %arg5[%c0_23, %c0_24] : memref<8x128xf32, #tpu.memory_space<vmem>>, vector<1x128xf32>
      %c1 = arith.constant 1 : index
      %c0_25 = arith.constant 0 : index
      %41 = vector.load %arg5[%c1, %c0_25] : memref<8x128xf32, #tpu.memory_space<vmem>>, vector<1x128xf32>
      %c0_26 = arith.constant 0 : index
      %c0_27 = arith.constant 0 : index
      %42 = vector.load %arg8[%c0_26, %c0_27] : memref<8x128xf32, #tpu.memory_space<vmem>>, vector<8x128xf32>
      %43 = vector.broadcast %40 : vector<1x128xf32> to vector<8x128xf32>
      %44 = arith.addf %42, %43 : vector<8x128xf32>
      %cst_28 = arith.constant 0.000000e+00 : f32
      %45 = vector.broadcast %cst_28 : f32 to vector<8x128xf32>
      %46 = arith.maximumf %44, %45 : vector<8x128xf32>
      %47 = vector.broadcast %41 : vector<1x128xf32> to vector<8x128xf32>
      %48 = arith.mulf %46, %47 : vector<8x128xf32>
      %cst_29 = arith.constant dense<0.000000e+00> : vector<8xf32>
      %49 = vector.multi_reduction <add>, %48, %cst_29 [1] : vector<8x128xf32> to vector<8xf32>
      %50 = vector.shape_cast %49 : vector<8xf32> to vector<8x1xf32>
      %cst_30 = arith.constant 0.000000e+00 : f32
      %51 = vector.broadcast %cst_30 : f32 to vector<8x1xf32>
      %52 = arith.subf %51, %50 : vector<8x1xf32>
      %53 = math.exp %52 : vector<8x1xf32>
      %cst_31 = arith.constant 1.000000e+00 : f32
      %54 = vector.broadcast %cst_31 : f32 to vector<8x1xf32>
      %55 = arith.addf %54, %53 : vector<8x1xf32>
      %56 = tpu.reciprocal %55 : vector<8x1xf32> -> vector<8x1xf32>
      %c1_32 = arith.constant 1 : index
      %57 = memref.load %arg7[%c1_32] : memref<2xf32, #tpu.memory_space<smem>>
      %58 = vector.shape_cast %56 : vector<8x1xf32> to vector<1x8x1xf32>
      %cst_33 = arith.constant dense<0.000000e+00> : vector<1xf32>
      %59 = vector.multi_reduction <add>, %58, %cst_33 [1, 2] : vector<1x8x1xf32> to vector<1xf32>
      %60 = vector.shape_cast %59 : vector<1xf32> to vector<1x1x1xf32>
      %61 = vector.extract %60[0, 0, 0] : f32 from vector<1x1x1xf32>
      %62 = arith.addf %57, %61 : f32
      %c1_34 = arith.constant 1 : index
      %63 = memref.load %arg7[%c1_34] : memref<2xf32, #tpu.memory_space<smem>>
      memref.store %62, %arg7[%c1_34] : memref<2xf32, #tpu.memory_space<smem>>
    } else {
    }
    %c0_i32_20 = arith.constant 0 : i32
    %35 = arith.cmpi eq, %arg0, %c0_i32_20 : i32
    %c1_i32_21 = arith.constant 1 : i32
    %36 = arith.cmpi eq, %arg1, %c1_i32_21 : i32
    %37 = arith.andi %35, %36 : i1
    %38 = arith.extui %37 : i1 to i32
    %c0_i32_22 = arith.constant 0 : i32
    %39 = arith.cmpi ne, %38, %c0_i32_22 : i32
    scf.if %39 {
      %c0_23 = arith.constant 0 : index
      %40 = memref.load %arg7[%c0_23] : memref<2xf32, #tpu.memory_space<smem>>
      %c0_24 = arith.constant 0 : index
      %41 = memref.load %arg6[%c0_24] : memref<2xf32, #tpu.memory_space<smem>>
      memref.store %40, %arg6[%c0_24] : memref<2xf32, #tpu.memory_space<smem>>
      %c1 = arith.constant 1 : index
      %42 = memref.load %arg7[%c1] : memref<2xf32, #tpu.memory_space<smem>>
      %c1_25 = arith.constant 1 : index
      %43 = memref.load %arg6[%c1_25] : memref<2xf32, #tpu.memory_space<smem>>
      memref.store %42, %arg6[%c1_25] : memref<2xf32, #tpu.memory_space<smem>>
    } else {
    }
    return
  }
  func.func @transform_0(%arg0: i32, %arg1: i32) -> (i32, i32) {
    %c0_i32 = arith.constant 0 : i32
    return %arg0, %arg1 : i32, i32
  }
  func.func @transform_1(%arg0: i32, %arg1: i32) -> (i32, i32) {
    %c0_i32 = arith.constant 0 : i32
    return %arg0, %arg1 : i32, i32
  }
  func.func @transform_2(%arg0: i32, %arg1: i32) -> (i32, i32) {
    %c0_i32 = arith.constant 0 : i32
    %c0_i32_0 = arith.constant 0 : i32
    return %arg1, %c0_i32 : i32, i32
  }
  func.func @transform_3(%arg0: i32, %arg1: i32) -> (i32, i32) {
    %c0_i32 = arith.constant 0 : i32
    %c0_i32_0 = arith.constant 0 : i32
    %c0_i32_1 = arith.constant 0 : i32
    return %c0_i32, %c0_i32_0 : i32, i32
  }
  func.func @transform_4(%arg0: i32, %arg1: i32) -> i32 {
    %c0_i32 = arith.constant 0 : i32
    %c0_i32_0 = arith.constant 0 : i32
    return %c0_i32 : i32
  }
}

</mosaic_0001>

<llo_original>
// kernel: gan_d_mse_loss.1
$region0: #{gan_d_mse_loss.1}
  #allocation0 [shape = 'u32[]', space=smem, size = 0x4, offset = 0x4, fixed_abs, tag = 'smem constant byte address 0x4 - core index']
  #allocation1 [shape = 'u32[144,128]{1,0:T(1,128)}', space=vmem, size = 0x12000, scoped, tag = 'internal scratch']
  #allocation2 [shape = 'f32[2]{0:T(128)}', space=smem, size = 0x200, scoped, tag = 'scratch operand']
  #allocation3 [shape = 'f32[8,128]{1,0:T(8,128)}', space=vmem, size = 0x1000, scoped, tag = 'scratch operand']
  %s0 = inlined_call_operand.vmem [shape: f32[8,256], index: 0, kind: input, shape index: {}]
  %s1 = inlined_call_operand.vmem [shape: f32[8,256], index: 1, kind: input, shape index: {}]
  %s2 = inlined_call_operand.vmem [shape: f32[256,128], index: 2, kind: input, shape index: {}]
  %s3 = inlined_call_operand.vmem [shape: f32[8,128], index: 3, kind: input, shape index: {}]
  %s4 = inlined_call_operand.vmem [shape: f32[2], index: 4, kind: output, shape index: {}]
  %s5 = sld [smem:[#allocation0]]
  $region65: #{gan_d_mse_loss.1} parent=0
    _
  %s7 = ssub.s32 1, %s5
  %s8 = scalar_select 0, %s7, %s5
  $region1: #{gan_d_mse_loss.1} parent=0
    #allocation4 [shape = 'u8[512]{0}', space=smem, size = 0x200, scoped, tag = 'output window, operand 0, single buffered']
    #allocation5 [shape = 's32[2]{0}', space=sflag, size = 0x8, scoped, tag = 'scoped memory for gan_d_mse_loss.1']
    %9 = vsyncpa [#allocation5], 0
    loop: start=0, step=1, limit=4
    $region2: #{gan_d_mse_loss.1} parent=1 // loop_pre_header
      _
    $region3: #{gan_d_mse_loss.1} parent=1 // loop_header
      %s11 = sphi 0, %s15
      %p12 = scmp.ge.s32.totalorder %s11, 4
      %s18 = sphi 0, %s30
      %s19 = sphi 0, %s26
      %s20 = sphi 0, %s18
      %s21 = sphi 0, %s19
      %s22 = sphi 0, %s20
      %s23 = sphi 0, %s21
      %s35 = sphi 0, %s37
      %s38 = sphi 0, %s35
      %s39 = sphi 0, %s38
      %s55 = sphi 0, %s39
      %s63 = sphi 0, %s65
      %s66 = sphi 0, %s63
      %s67 = sphi 0, %s66
      %s83 = sphi 0, %s67
      %s89 = sphi 0, %s91
      %s92 = sphi 0, %s89
      %s93 = sphi 0, %s92
      %s109 = sphi 0, %s93
      %s113 = sphi 0, %s113
      %s115 = sphi 0, %s113
      %s116 = sphi 0, %s115
      %s130 = sphi 0, %s116
      %s134 = sphi 0, %s134
      %s136 = sphi 0, %s134
      %s137 = sphi 0, %s136
      %s151 = sphi 0, %s137
    $region4: #{gan_d_mse_loss.1} parent=1 // loop_header_branch
      %14 = sbr.rel (%p12) target = $region8
    $region5: #{gan_d_mse_loss.1} parent=1 // loop_body
      %s16 = ssub.s32 %s11, 1
      %s17 = ssub.s32 %s11, 2
      %s24 = sadd.s32 1, %s19
      %p25 = scmp.ge.s32.totalorder %s24, 2
      %s26 = scalar_select %p25, 0, %s24
      %s27 = sadd.s32 1, %s18
      %s28 = scalar_select %p25, %s27, %s18
      %p29 = scmp.ge.s32.totalorder %s28, 1
      %s30 = scalar_select %p29, 0, %s28
      %s31 = ssub.s32 %s18, %s30
      %s32 = ssub.s32 %s19, %s26
      %s33 = sor.u32 %s31, %s32
      %p34 = scmp.eq.s32.totalorder %s33, 0
      %s36 = sadd.s32 %s35, 1
      %s37 = scalar_select %p34, %s35, %s36
      %p40 = pneg %p34
      %p41 = scmp.eq.s32.totalorder %s11, 1
      %p42 = por %p40, %p41
      %p43 = scmp.ne.s32.totalorder %s35, %s38
      %p44 = scmp.eq.s32.totalorder %s11, 0
      %p45 = por %p43, %p44
      %p46 = scmp.ne.s32.totalorder %s35, %s38
      %p47 = scmp.eq.s32.totalorder %s16, 1
      %p48 = por %p46, %p47
      %p49 = scmp.ne.s32.totalorder %s38, %s39
      %p50 = scmp.eq.s32.totalorder %s16, 0
      %p51 = por %p49, %p50
      %p52 = scmp.ne.s32.totalorder %s38, %s39
      %p53 = scmp.eq.s32.totalorder %s17, 1
      %p54 = por %p52, %p53
      %p56 = scmp.ne.s32.totalorder %s39, %s55
      %p57 = scmp.eq.s32.totalorder %s17, 0
      %p58 = por %p56, %p57
      %s59 = ssub.s32 %s18, %s30
      %s60 = ssub.s32 %s19, %s26
      %s61 = sor.u32 %s59, %s60
      %p62 = scmp.eq.s32.totalorder %s61, 0
      %s64 = sadd.s32 %s63, 1
      %s65 = scalar_select %p62, %s63, %s64
      %p68 = pneg %p62
      %p69 = scmp.eq.s32.totalorder %s11, 1
      %p70 = por %p68, %p69
      %p71 = scmp.ne.s32.totalorder %s63, %s66
      %p72 = scmp.eq.s32.totalorder %s11, 0
      %p73 = por %p71, %p72
      %p74 = scmp.ne.s32.totalorder %s63, %s66
      %p75 = scmp.eq.s32.totalorder %s16, 1
      %p76 = por %p74, %p75
      %p77 = scmp.ne.s32.totalorder %s66, %s67
      %p78 = scmp.eq.s32.totalorder %s16, 0
      %p79 = por %p77, %p78
      %p80 = scmp.ne.s32.totalorder %s66, %s67
      %p81 = scmp.eq.s32.totalorder %s17, 1
      %p82 = por %p80, %p81
      %p84 = scmp.ne.s32.totalorder %s67, %s83
      %p85 = scmp.eq.s32.totalorder %s17, 0
      %p86 = por %p84, %p85
      %s87 = ssub.s32 %s19, %s26
      %p88 = scmp.eq.s32.totalorder %s87, 0
      %s90 = sadd.s32 %s89, 1
      %s91 = scalar_select %p88, %s89, %s90
      %p94 = pneg %p88
      %p95 = scmp.eq.s32.totalorder %s11, 1
      %p96 = por %p94, %p95
      %p97 = scmp.ne.s32.totalorder %s89, %s92
      %p98 = scmp.eq.s32.totalorder %s11, 0
      %p99 = por %p97, %p98
      %p100 = scmp.ne.s32.totalorder %s89, %s92
      %p101 = scmp.eq.s32.totalorder %s16, 1
      %p102 = por %p100, %p101
      %p103 = scmp.ne.s32.totalorder %s92, %s93
      %p104 = scmp.eq.s32.totalorder %s16, 0
      %p105 = por %p103, %p104
      %p106 = scmp.ne.s32.totalorder %s92, %s93
      %p107 = scmp.eq.s32.totalorder %s17, 1
      %p108 = por %p106, %p107
      %p110 = scmp.ne.s32.totalorder %s93, %s109
      %p111 = scmp.eq.s32.totalorder %s17, 0
      %p112 = por %p110, %p111
      %s114 = sadd.s32 %s113, 1
      %p117 = scmp.eq.s32.totalorder %s11, 1
      %p118 = scmp.ne.s32.totalorder %s113, %s115
      %p119 = scmp.eq.s32.totalorder %s11, 0
      %p120 = por %p118, %p119
      %p121 = scmp.ne.s32.totalorder %s113, %s115
      %p122 = scmp.eq.s32.totalorder %s16, 1
      %p123 = por %p121, %p122
      %p124 = scmp.ne.s32.totalorder %s115, %s116
      %p125 = scmp.eq.s32.totalorder %s16, 0
      %p126 = por %p124, %p125
      %p127 = scmp.ne.s32.totalorder %s115, %s116
      %p128 = scmp.eq.s32.totalorder %s17, 1
      %p129 = por %p127, %p128
      %p131 = scmp.ne.s32.totalorder %s116, %s130
      %p132 = scmp.eq.s32.totalorder %s17, 0
      %p133 = por %p131, %p132
      %s135 = sadd.s32 %s134, 1
      %p138 = scmp.eq.s32.totalorder %s11, 1
      %p139 = scmp.ne.s32.totalorder %s134, %s136
      %p140 = scmp.eq.s32.totalorder %s11, 0
      %p141 = por %p139, %p140
      %p142 = scmp.ne.s32.totalorder %s134, %s136
      %p143 = scmp.eq.s32.totalorder %s16, 1
      %p144 = por %p142, %p143
      %p145 = scmp.ne.s32.totalorder %s136, %s137
      %p146 = scmp.eq.s32.totalorder %s16, 0
      %p147 = por %p145, %p146
      %p148 = scmp.ne.s32.totalorder %s136, %s137
      %p149 = scmp.eq.s32.totalorder %s17, 1
      %p150 = por %p148, %p149
      %p152 = scmp.ne.s32.totalorder %s137, %s151
      %p153 = scmp.eq.s32.totalorder %s17, 0
      %p154 = por %p152, %p153
      %p155 = scmp.le.s32.totalorder 1, %s11
      %p156 = scmp.lt.s32.totalorder %s11, 3
      %p157 = pnand %p155, %p156
      %p158 = pneg %p157
      // Predicated region
      $region9: #{gan_d_mse_loss.1} parent=5 // pred_check
        _
      $region10: #{gan_d_mse_loss.1} parent=5 // pred_check_branch
        %160 = sbr.rel (%p157) target = $region12
      $region11: #{gan_d_mse_loss.1} parent=5 // pred_region
        %s161 = ssub.s32 %s11, 1
        // Predicated region
        $region13: #{gan_d_mse_loss.1} parent=11 // pred_check
          %p162 = pneg %p126
        $region14: #{gan_d_mse_loss.1} parent=11 // pred_check_branch
          %164 = sbr.rel (%p162) target = $region16
        $region15: #{gan_d_mse_loss.1} parent=11 // pred_region
          _
        $region16: #{gan_d_mse_loss.1} parent=11 // pred_fallthru
          _
      $region12: #{gan_d_mse_loss.1} parent=5 // pred_fallthru
        _
      %p165 = scmp.lt.s32.totalorder %s11, 2
      // Predicated region
      $region17: #{gan_d_mse_loss.1} parent=5 // pred_check
        %p166 = pneg %p165
      $region18: #{gan_d_mse_loss.1} parent=5 // pred_check_branch
        %168 = sbr.rel (%p166) target = $region20
      $region19: #{gan_d_mse_loss.1} parent=5 // pred_region
        // Predicated region
        $region21: #{gan_d_mse_loss.1} parent=19 // pred_check
          %p169 = pneg %p45
        $region22: #{gan_d_mse_loss.1} parent=19 // pred_check_branch
          %171 = sbr.rel (%p169) target = $region24
        $region23: #{gan_d_mse_loss.1} parent=19 // pred_region
          %p172 = scmp.lt.s32.totalorder %s18, 0
          %s173 = scalar_select %p172, %s18, 0
          %p174 = scmp.lt.s32.totalorder %s19, 1
          %s175 = scalar_select %p174, %s19, 1
          %s176 = smul.addr %s173, 2
          %s177 = sadd.s32 %s175, %s176
          %s178 = smul.addr %s177, 8
          %s179 = scalar_lea.vmem %s0, %s178
        $region24: #{gan_d_mse_loss.1} parent=19 // pred_fallthru
          _
        // Predicated region
        $region25: #{gan_d_mse_loss.1} parent=19 // pred_check
          %p180 = pneg %p73
        $region26: #{gan_d_mse_loss.1} parent=19 // pred_check_branch
          %182 = sbr.rel (%p180) target = $region28
        $region27: #{gan_d_mse_loss.1} parent=19 // pred_region
          %p183 = scmp.lt.s32.totalorder %s18, 0
          %s184 = scalar_select %p183, %s18, 0
          %p185 = scmp.lt.s32.totalorder %s19, 1
          %s186 = scalar_select %p185, %s19, 1
          %s187 = smul.addr %s184, 2
          %s188 = sadd.s32 %s186, %s187
          %s189 = smul.addr %s188, 8
          %s190 = scalar_lea.vmem %s1, %s189
        $region28: #{gan_d_mse_loss.1} parent=19 // pred_fallthru
          _
        // Predicated region
        $region29: #{gan_d_mse_loss.1} parent=19 // pred_check
          %p191 = pneg %p99
        $region30: #{gan_d_mse_loss.1} parent=19 // pred_check_branch
          %193 = sbr.rel (%p191) target = $region32
        $region31: #{gan_d_mse_loss.1} parent=19 // pred_region
          %s194 = smul.u32 16, %s19
          %p195 = scmp.lt.s32.totalorder %s194, 31
          %s196 = scalar_select %p195, %s194, 31
          %s197 = smul.addr %s196, 8
          %s198 = scalar_lea.vmem %s2, %s197
          %s199 = smul.u32 16, %s19
        $region32: #{gan_d_mse_loss.1} parent=19 // pred_fallthru
          _
      $region20: #{gan_d_mse_loss.1} parent=5 // pred_fallthru
        _
      %p200 = scmp.le.s32.totalorder 1, %s11
      %p201 = scmp.lt.s32.totalorder %s11, 3
      %p202 = pnand %p200, %p201
      %p203 = pneg %p202
      // Predicated region
      $region33: #{gan_d_mse_loss.1} parent=5 // pred_check
        _
      $region34: #{gan_d_mse_loss.1} parent=5 // pred_check_branch
        %205 = sbr.rel (%p202) target = $region36
      $region35: #{gan_d_mse_loss.1} parent=5 // pred_region
        %s206 = ssub.s32 %s11, 1
        %p207 = scmp.lt.s32.totalorder %s20, 0
        %s208 = scalar_select %p207, %s20, 0
        %p209 = scmp.lt.s32.totalorder %s21, 1
        %s210 = scalar_select %p209, %s21, 1
        %s211 = smul.addr %s208, 2
        %s212 = sadd.s32 %s210, %s211
        %s213 = smul.addr %s212, 8
        %s214 = scalar_lea.vmem %s0, %s213
        %p215 = pneg %p51
        %p216 = pneg %p48
        %p217 = scmp.lt.s32.totalorder %s20, 0
        %s218 = scalar_select %p217, %s20, 0
        %p219 = scmp.lt.s32.totalorder %s21, 1
        %s220 = scalar_select %p219, %s21, 1
        %s221 = smul.addr %s218, 2
        %s222 = sadd.s32 %s220, %s221
        %s223 = smul.addr %s222, 8
        %s224 = scalar_lea.vmem %s1, %s223
        %p225 = pneg %p79
        %p226 = pneg %p76
        %s227 = smul.u32 16, %s21
        %p228 = scmp.lt.s32.totalorder %s227, 31
        %s229 = scalar_select %p228, %s227, 31
        %s230 = smul.addr %s229, 8
        %s231 = scalar_lea.vmem %s2, %s230
        %p232 = pneg %p105
        %p233 = pneg %p102
        %p234 = pneg %p126
        %p235 = pneg %p123
        %p236 = pneg %p147
        %p237 = pneg %p144
        %p238 = scmp.lt.s32.totalorder %s20, 0
        %s239 = scalar_select %p238, %s20, 0
        %p240 = scmp.lt.s32.totalorder %s21, 1
        %s241 = scalar_select %p240, %s21, 1
        %s242 = smul.addr %s239, 2
        %s243 = sadd.s32 %s241, %s242
        %s244 = smul.addr %s243, 8
        %s245 = scalar_lea.vmem %s0, %s244
        %p246 = scmp.lt.s32.totalorder %s20, 0
        %s247 = scalar_select %p246, %s20, 0
        %p248 = scmp.lt.s32.totalorder %s21, 1
        %s249 = scalar_select %p248, %s21, 1
        %s250 = smul.addr %s247, 2
        %s251 = sadd.s32 %s249, %s250
        %s252 = smul.addr %s251, 8
        %s253 = scalar_lea.vmem %s1, %s252
        %s254 = smul.u32 16, %s21
        %p255 = scmp.lt.s32.totalorder %s254, 31
        %s256 = scalar_select %p255, %s254, 31
        %s257 = smul.addr %s256, 8
        %s258 = scalar_lea.vmem %s2, %s257
        %s259 = smul.u32 16, %s21
        %p260 = scmp.eq.s32.totalorder %s20, 0
        %p261 = scmp.eq.s32.totalorder %s21, 0
        %p262 = pnand %p260, %p261
        %p263 = pneg %p262
        // Predicated region
        $region37: #{gan_d_mse_loss.1} parent=35 // pred_check
          _
        $region38: #{gan_d_mse_loss.1} parent=35 // pred_check_branch
          %265 = sbr.rel (%p262) target = $region40
        $region39: #{gan_d_mse_loss.1} parent=35 // pred_region
          %s266 = scalar_lea.smem [#allocation2], 0
          %267 = sst [smem:[%s266]] 0.0
          %s268 = scalar_lea.smem [#allocation2], 1
          %269 = sst [smem:[%s268]] 0.0
        $region40: #{gan_d_mse_loss.1} parent=35 // pred_fallthru
          _
        // Predicated region
        $region41: #{gan_d_mse_loss.1} parent=35 // pred_check
          %p270 = pneg %p261
        $region42: #{gan_d_mse_loss.1} parent=35 // pred_check_branch
          %272 = sbr.rel (%p270) target = $region44
        $region43: #{gan_d_mse_loss.1} parent=35 // pred_region
          %273 = vst [vmem:[#allocation3] sm:$0xff] 0.0
        $region44: #{gan_d_mse_loss.1} parent=35 // pred_fallthru
          _
        %v274 = vld [vmem:[%s245] sm:$0xff]
        %v275 = vld [vmem:[%s253] sm:$0xff]
        %v276 = vsub.f32 %v274, %v275
        %s277 = sld [smem:[#allocation2]]
        %v278 = vmul.f32 %v276, %v276
        %279 = vadd.xlane.f32.xlu0 %v278
        %v280 = vpop.xlane.xlu0 %279
        %v281 = vrot.slane %v280, 4
        %v282 = vadd.f32 %v280, %v281
        %v283 = vrot.slane %v282, 2
        %v284 = vadd.f32 %v282, %v283
        %v285 = vrot.slane %v284, 1
        %v286 = vadd.f32 %v284, %v285
        %s287 = vtos %v286
        %s288 = sadd.f32 %s277, %s287
        %s289 = scalar_lea.smem [#allocation2], 0
        %290 = sst [smem:[%s289]] %s288
        %v291 = vmax.f32 %v274, 0.0
        %v292 = vmin.f32 %v291, 1.0
        %v293 = vlog2.pop %v292
        %v294 = vmul.f32 %v293, 0.6931472
        %v295 = vmul.f32 %v294, 0.33333334
        %v296 = vmul.f32 %v295, 1.442695
        %v297 = vpow.pop %v296
        %v298 = vld [vmem:[#allocation3] sm:$0xff]
        %v299 = vld [vmem:[%s258] sm:$0xff]
        %v300 = vld [vmem:[%s258 + $0x8] sm:$0xff]
        %v301 = vld [vmem:[%s258 + $0x10] sm:$0xff]
        %v302 = vld [vmem:[%s258 + $0x18] sm:$0xff]
        %v303 = vld [vmem:[%s258 + $0x20] sm:$0xff]
        %v304 = vld [vmem:[%s258 + $0x28] sm:$0xff]
        %v305 = vld [vmem:[%s258 + $0x30] sm:$0xff]
        %v306 = vld [vmem:[%s258 + $0x38] sm:$0xff]
        %v307 = vld [vmem:[%s258 + $0x40] sm:$0xff]
        %v308 = vld [vmem:[%s258 + $0x48] sm:$0xff]
        %v309 = vld [vmem:[%s258 + $0x50] sm:$0xff]
        %v310 = vld [vmem:[%s258 + $0x58] sm:$0xff]
        %v311 = vld [vmem:[%s258 + $0x60] sm:$0xff]
        %v312 = vld [vmem:[%s258 + $0x68] sm:$0xff]
        %v313 = vld [vmem:[%s258 + $0x70] sm:$0xff]
        %v314 = vld [vmem:[%s258 + $0x78] sm:$0xff]
        %315 = vmatprep.subr.mxu0 0.0
        %316 = vmatpush1.msra.mxu0 %v299
        %317 = vmatprep.subr.mxu0 0.0
        %318 = vmatpush1.msra.mxu0 %v300
        %319 = vmatprep.subr.mxu0 0.0
        %320 = vmatpush1.msra.mxu0 %v301
        %321 = vmatprep.subr.mxu0 0.0
        %322 = vmatpush1.msra.mxu0 %v302
        %323 = vmatprep.subr.mxu0 0.0
        %324 = vmatpush1.msra.mxu0 %v303
        %325 = vmatprep.subr.mxu0 0.0
        %326 = vmatpush1.msra.mxu0 %v304
        %327 = vmatprep.subr.mxu0 0.0
        %328 = vmatpush1.msra.mxu0 %v305
        %329 = vmatprep.subr.mxu0 0.0
        %330 = vmatpush1.msra.mxu0 %v306
        %331 = vmatprep.subr.mxu0 0.0
        %332 = vmatpush1.msra.mxu0 %v307
        %333 = vmatprep.subr.mxu0 0.0
        %334 = vmatpush1.msra.mxu0 %v308
        %335 = vmatprep.subr.mxu0 0.0
        %336 = vmatpush1.msra.mxu0 %v309
        %337 = vmatprep.subr.mxu0 0.0
        %338 = vmatpush1.msra.mxu0 %v310
        %339 = vmatprep.subr.mxu0 0.0
        %340 = vmatpush1.msra.mxu0 %v311
        %341 = vmatprep.subr.mxu0 0.0
        %342 = vmatpush1.msra.mxu0 %v312
        %343 = vmatprep.subr.mxu0 0.0
        %344 = vmatpush1.msra.mxu0 %v313
        %345 = vmatprep.subr.mxu0 0.0
        %346 = vmatpush1.msra.mxu0 %v314
        %347 = vmatprep.subr.mxu0 0.0
        %348 = vmatpush1.msra.mxu0 0.0
        %349 = vmatprep.subr.mxu0 0.0
        %350 = vmatpush1.msra.mxu0 0.0
        %351 = vmatprep.subr.mxu0 0.0
        %352 = vmatpush1.msra.mxu0 0.0
        %353 = vmatprep.subr.mxu0 0.0
        %354 = vmatpush1.msra.mxu0 0.0
        %355 = vmatprep.subr.mxu0 0.0
        %356 = vmatpush1.msra.mxu0 0.0
        %357 = vmatprep.subr.mxu0 0.0
        %358 = vmatpush1.msra.mxu0 0.0
        %359 = vmatprep.subr.mxu0 0.0
        %360 = vmatpush1.msra.mxu0 0.0
        %361 = vmatprep.subr.mxu0 0.0
        %362 = vmatpush1.msra.mxu0 0.0
        %363 = vmatprep.subr.mxu0 0.0
        %364 = vmatpush1.msra.mxu0 0.0
        %365 = vmatprep.subr.mxu0 0.0
        %366 = vmatpush1.msra.mxu0 0.0
        %367 = vmatprep.subr.mxu0 0.0
        %368 = vmatpush1.msra.mxu0 0.0
        %369 = vmatprep.subr.mxu0 0.0
        %370 = vmatpush1.msra.mxu0 0.0
        %371 = vmatprep.subr.mxu0 0.0
        %372 = vmatpush1.msra.mxu0 0.0
        %373 = vmatprep.subr.mxu0 0.0
        %374 = vmatpush1.msra.mxu0 0.0
        %375 = vmatprep.subr.mxu0 0.0
        %376 = vmatpush1.msra.mxu0 0.0
        %377 = vmatprep.subr.mxu0 0.0
        %378 = vmatpush1.msra.mxu0 0.0
        %379 = vmatprep.mubr.f32.mxu0 0.0
        %380 = vmatmul.mubr.f32.gmra.mrb[0].mxu0 %v297
        %v381 = vpop.f32.mrb[0].mxu0
        %v382 = vadd.f32 0.0, %v381
        %v383 = vpop.f32.mrb[0].mxu0
        %384 = vdwg.mxu0
        %v385 = vadd.f32 %v298, %v382
        %386 = vst [vmem:[#allocation3] sm:$0xff] %v385
        %p387 = scmp.eq.s32.totalorder %s21, 1
        // Predicated region
        $region45: #{gan_d_mse_loss.1} parent=35 // pred_check
          %p388 = pneg %p387
        $region46: #{gan_d_mse_loss.1} parent=35 // pred_check_branch
          %390 = sbr.rel (%p388) target = $region48
        $region47: #{gan_d_mse_loss.1} parent=35 // pred_region
          %v391 = vld [vmem:[%s3] sm:$0x1]
          %v392 = vld [vmem:[%s3 + $0x1] sm:$0x1]
          %v393 = vld [vmem:[#allocation3] sm:$0xff]
          %v394 = vlaneseq
          %v395 = vshrl.u32 %v394, 7
          %v396 = vsub.s32 0, %v395
          %v397 = vrot.slane %v391, %v396
          %v398 = vadd.f32 %v393, %v397
          %v399 = vmax.f32 %v398, 0.0
          %v400 = vlaneseq
          %v401 = vshrl.u32 %v400, 7
          %v402 = vsub.s32 0, %v401
          %v403 = vrot.slane %v392, %v402
          %v404 = vmul.f32 %v399, %v403
          %405 = vadd.xlane.f32.xlu0 %v404
          %v406 = vpop.xlane.xlu0 %405
          %v407 = vsub.f32 0.0, %v406
          %v408 = vmul.f32 %v407, 1.442695
          %v409 = vpow.pop %v408
          %v410 = vadd.f32 %v409, 1.0
          %v411 = vrcp.pop %v410
          %s412 = sld [smem:[#allocation2 + $0x1]]
          %vm413 = vcmask 7168
          %v414 = vsel %vm413, %v411, 0.0
          %415 = vadd.xlane.f32.xlu0 %v414
          %v416 = vpop.xlane.xlu0 %415
          %v417 = vrot.slane %v416, 4
          %v418 = vadd.f32 %v416, %v417
          %v419 = vrot.slane %v418, 2
          %v420 = vadd.f32 %v418, %v419
          %v421 = vrot.slane %v420, 1
          %v422 = vadd.f32 %v420, %v421
          %s423 = vtos %v422
          %s424 = sadd.f32 %s412, %s423
          %s425 = scalar_lea.smem [#allocation2], 1
          %426 = sst [smem:[%s425]] %s424
        $region48: #{gan_d_mse_loss.1} parent=35 // pred_fallthru
          _
        %p427 = pnand %p260, %p387
        %p428 = pneg %p427
        // Predicated region
        $region49: #{gan_d_mse_loss.1} parent=35 // pred_check
          _
        $region50: #{gan_d_mse_loss.1} parent=35 // pred_check_branch
          %430 = sbr.rel (%p427) target = $region52
        $region51: #{gan_d_mse_loss.1} parent=35 // pred_region
          %s431 = sld [smem:[#allocation2]]
          %s432 = scalar_lea.smem [#allocation4], 0
          %433 = sst [smem:[%s432]] %s431
          %s434 = sld [smem:[#allocation2 + $0x1]]
          %s435 = scalar_lea.smem [#allocation4], 1
          %436 = sst [smem:[%s435]] %s434
        $region52: #{gan_d_mse_loss.1} parent=35 // pred_fallthru
          _
        // Predicated region
        $region53: #{gan_d_mse_loss.1} parent=35 // pred_check
          %p437 = pneg %p144
        $region54: #{gan_d_mse_loss.1} parent=35 // pred_check_branch
          %439 = sbr.rel (%p437) target = $region56
        $region55: #{gan_d_mse_loss.1} parent=35 // pred_region
          %s441 = ssub.s32 16, 16
          %442 = vsyncadd [#allocation5], %s441
          %s444 = sshll.u32 %s4, 4
          %s445 = int_to_ptr.vmem [resolvable:$true] %s444
          %447 = dma.smem_to_vmem [#allocation4], 16, %s445, [#allocation5]
        $region56: #{gan_d_mse_loss.1} parent=35 // pred_fallthru
          _
        // Predicated region
        $region57: #{gan_d_mse_loss.1} parent=35 // pred_check
          %p448 = pneg %p144
        $region58: #{gan_d_mse_loss.1} parent=35 // pred_check_branch
          %450 = sbr.rel (%p448) target = $region60
        $region59: #{gan_d_mse_loss.1} parent=35 // pred_region
          %451 = dma.done [#allocation5], 16
        $region60: #{gan_d_mse_loss.1} parent=35 // pred_fallthru
          _
        %452 = sfence
      $region36: #{gan_d_mse_loss.1} parent=5 // pred_fallthru
        _
      %p453 = scmp.le.s32.totalorder 2, %s11
      // Predicated region
      $region61: #{gan_d_mse_loss.1} parent=5 // pred_check
        %p454 = pneg %p453
      $region62: #{gan_d_mse_loss.1} parent=5 // pred_check_branch
        %456 = sbr.rel (%p454) target = $region64
      $region63: #{gan_d_mse_loss.1} parent=5 // pred_region
        %s457 = ssub.s32 %s11, 2
      $region64: #{gan_d_mse_loss.1} parent=5 // pred_fallthru
        _
    $region6: #{gan_d_mse_loss.1} parent=1 // loop_footer
      %s15 = sadd.s32 1, %s11
    $region7: #{gan_d_mse_loss.1} parent=1 // loop_footer_branch
      %10 = sbr.rel target = $region3
    $region8: #{gan_d_mse_loss.1} parent=1 // loop_exit
      _
    %458 = vsyncpa [#allocation5], 1
    %s459 = scalar_lea.sflag [#allocation5], 1
    %460 = vsyncpa %s459, 1

</llo_original>
